<compile_context>
chip_gen: v7x
topology: tpu7x:2x2x1
jax: 0.10.0
libtpu: 0.0.40
codegen_flags: <defaults>
</compile_context>

<pallas_src>
import numpy as np
import jax
import jax.numpy as jnp
from jax.experimental import pallas as pl
from jax.experimental.pallas import tpu as pltpu


def _round_up(n, m):
    return ((n + m - 1) // m) * m


def _pick_tile(B, block_rows):
    """Batch-tile size: one tile for small B, else multiples of 128 rows,
    preferring an even tile count (v7x shards the parallel axis over 2 TCs)."""
    if _round_up(B, 8) <= block_rows:
        return _round_up(B, 8)
    base = _round_up(block_rows, 128)
    tm = base
    while tm >= max(128, base // 2):
        if pl.cdiv(B, tm) % 2 == 0:
            return tm
        tm -= 128
    return base


def _ne_mot_kernel(x_ref, w1_ref, b1_ref, w2_ref, b2_ref, o_ref):
    # In-kernel cast of the f32 x tile to the matmul dtype (no-op if f32);
    # the cast runs on the VPU and is hidden under the MXU / DMA pipeline.
    x = x_ref[...].astype(w1_ref.dtype)
    # fc1 on the MXU: (TM, D) @ (D, D), f32 accumulation.
    h = jnp.dot(x, w1_ref[...], preferred_element_type=jnp.float32)
    # bias + ReLU on the VPU in f32 (safe on v5e: no bf16 elementwise needed).
    h = jnp.maximum(h + b1_ref[...], 0.0)
    # fc2 as an MXU matvec: (TM, D) @ (D, 1) -> (TM, 1). No XLU lane-reduce,
    # no sublane->lane relayout; output block matches the module's (B, 1).
    out = jnp.dot(h, w2_ref[...], preferred_element_type=jnp.float32)
    o_ref[...] = out + b2_ref[0]          # scalar bias from SMEM


def ne_mot_forward(x, w1, b1, w2, b2, *, block_rows=512,
                   matmul_dtype=jnp.bfloat16):
    """Pallas implementation of NE_mot_model.forward.

    x  : (B, D) float32
    w1 : (D, D) float32   fc1 weight in (in, out) layout.
                          NOTE: PyTorch nn.Linear stores (out, in) — pass
                          `torch_linear.weight.T` when porting real weights.
    b1 : (D,)   float32   fc1 bias
    w2 : (D,)   float32   fc2 weight (the single row of nn.Linear(D, 1).weight)
    b2 : (1,)   float32   fc2 bias
    returns (B, 1) float32
    """
    B, D = x.shape
    x = jnp.asarray(x, jnp.float32)                      # no wrapper bf16 cast
    w1c = jnp.asarray(w1).astype(matmul_dtype)           # pre-cast once (reused)
    b1 = jnp.asarray(b1, jnp.float32).reshape(1, D)
    w2c = jnp.asarray(w2, jnp.float32).reshape(D, 1)     # column for MXU matvec
    b2 = jnp.asarray(b2, jnp.float32).reshape(1,)

    tm = _pick_tile(B, block_rows)
    ntiles = pl.cdiv(B, tm)                              # partial last tile OK

    # VMEM budget: double-buffered f32 x tiles + single-buffered weights +
    # f32 intermediates, with headroom; capped by the device's physical VMEM.
    w_esize = np.dtype(matmul_dtype).itemsize
    est = (2 * tm * D * 4            # x tiles (f32, double-buffered)
           + D * D * w_esize         # w1 (single-buffered)
           + 3 * D * 4               # b1, w2
           + 2 * tm * 4              # output tiles
           + tm * D * 4              # h intermediate (f32)
           + (4 << 20))              # headroom
    try:
        phys = int(pltpu.get_tpu_info().vmem_capacity_bytes)
    except Exception:
        phys = 64 << 20              # conservative (v7x per-core) fallback
    cap = max(32 << 20, phys - (8 << 20))
    vmem_limit = int(min(max(est, 32 << 20), cap))

    def _resident_spec(shape, single_buffer):
        kwargs = {"pipeline_mode": pl.Buffered(1)} if single_buffer else {}
        return pl.BlockSpec(shape, lambda i: (0,) * len(shape), **kwargs)

    def _call(single_buffer_weights):
        return pl.pallas_call(
            _ne_mot_kernel,
            out_shape=jax.ShapeDtypeStruct((B, 1), jnp.float32),
            grid_spec=pl.GridSpec(
                grid=(ntiles,),
                in_specs=[
                    pl.BlockSpec((tm, D), lambda i: (i, 0)),   # x tile (pipelined)
                    _resident_spec((D, D), single_buffer_weights),  # w1
                    _resident_spec((1, D), single_buffer_weights),  # b1
                    _resident_spec((D, 1), single_buffer_weights),  # w2 column
                    pl.BlockSpec(memory_space=pltpu.MemorySpace.SMEM),  # b2 scalar
                ],
                out_specs=pl.BlockSpec((tm, 1), lambda i: (i, 0)),
            ),
            compiler_params=pltpu.CompilerParams(
                dimension_semantics=("parallel",),
                vmem_limit_bytes=vmem_limit,
            ),
        )(x, w1c, b1, w2c, b2)

    try:
        return _call(True)
    except Exception:
        # Fallback for jax versions without single-buffer pipeline_mode support.
        return _call(False)


def init_params(key, dim):
    """Deterministic init mirroring nn.Linear's U(-1/sqrt(fan_in), 1/sqrt(fan_in)).
    w1 is generated directly in (in, out) layout (transpose of PyTorch's)."""
    k1, k2, k3, k4 = jax.random.split(key, 4)
    bound = 1.0 / jnp.sqrt(jnp.float32(dim))
    w1 = jax.random.uniform(k1, (dim, dim), jnp.float32, -bound, bound)
    b1 = jax.random.uniform(k2, (dim,), jnp.float32, -bound, bound)
    w2 = jax.random.uniform(k3, (dim,), jnp.float32, -bound, bound)
    b2 = jax.random.uniform(k4, (1,), jnp.float32, -bound, bound)
    return w1, b1, w2, b2


def _check(out, x, w1, b1, w2, b2):
    # Reference 1: same bf16-input fc1 matmul (tight-ish check).
    h_ref = jnp.dot(x.astype(jnp.bfloat16), w1.astype(jnp.bfloat16),
                    preferred_element_type=jnp.float32)
    h_ref = jnp.maximum(h_ref + b1[None, :], 0.0)
    ref_bf16 = h_ref @ w2.reshape(-1, 1) + b2[0]
    assert jnp.allclose(out, ref_bf16, atol=1e-2, rtol=1e-2)
    # Reference 2: pure f32 math (loose check covering the bf16 cast).
    ref_f32 = jnp.maximum(x @ w1 + b1[None, :], 0.0) @ w2.reshape(-1, 1) + b2[0]
    assert jnp.allclose(out, ref_f32, atol=5e-2, rtol=5e-2)


if __name__ == "__main__":
    key = jax.random.PRNGKey(0)

    # Small shapes consistent with the module.
    k_x, k_p = jax.random.split(key)
    batch, dim = 8, 32
    x = jax.random.normal(k_x, (batch, dim), jnp.float32)
    w1, b1, w2, b2 = init_params(k_p, dim)
    out = jax.block_until_ready(ne_mot_forward(x, w1, b1, w2, b2))
    assert out.shape == (batch, 1)
    _check(out, x, w1, b1, w2, b2)

    # Multi-tile case with a ragged last tile (exercises the no-pad path and
    # the pipelined / single-buffered-weight BlockSpecs).
    k_x2, k_p2 = jax.random.split(jax.random.PRNGKey(1))
    batch2, dim2 = 600, 128
    x2 = jax.random.normal(k_x2, (batch2, dim2), jnp.float32)
    w1b, b1b, w2b, b2b = init_params(k_p2, dim2)
    out2 = jax.block_until_ready(ne_mot_forward(x2, w1b, b1b, w2b, b2b))
    assert out2.shape == (batch2, 1)
    _check(out2, x2, w1b, b1b, w2b, b2b)

    print("KERNEL_OK")
</pallas_src>

<mosaic_0001>
module attributes {stable_mosaic.version = 11 : i64} {
  func.func @_ne_mot_kernel(%arg0: i32, %arg1: memref<8x32xf32, #tpu.memory_space<vmem>>, %arg2: memref<32x32xbf16, #tpu.memory_space<vmem>>, %arg3: memref<1x32xf32, #tpu.memory_space<vmem>>, %arg4: memref<32x1xf32, #tpu.memory_space<vmem>>, %arg5: memref<1xf32, #tpu.memory_space<smem>>, %arg6: memref<8x1xf32, #tpu.memory_space<vmem>>) attributes {dimension_semantics = [#tpu.dimension_semantics<parallel>], iteration_bounds = array<i64: 1>, scalar_prefetch = 0 : i64, scratch_operands = 0 : i64, tpu.core_type = #tpu.core_type<tc>, window_params = [{transform_indices = @transform_0, window_bounds = array<i64: 8, 32>}, {pipeline_mode = #tpu.pipeline_mode<synchronous>, transform_indices = @transform_1, window_bounds = array<i64: 32, 32>}, {pipeline_mode = #tpu.pipeline_mode<synchronous>, transform_indices = @transform_2, window_bounds = array<i64: 1, 32>}, {pipeline_mode = #tpu.pipeline_mode<synchronous>, transform_indices = @transform_3, window_bounds = array<i64: 32, 1>}, {transform_indices = @transform_4, window_bounds = array<i64: 1>}, {transform_indices = @transform_5, window_bounds = array<i64: 8, 1>}]} {
    %c0 = arith.constant 0 : index
    %c0_0 = arith.constant 0 : index
    %0 = vector.load %arg1[%c0, %c0_0] : memref<8x32xf32, #tpu.memory_space<vmem>>, vector<8x32xf32>
    %1 = arith.truncf %0 : vector<8x32xf32> to vector<8x32xbf16>
    %c0_1 = arith.constant 0 : index
    %c0_2 = arith.constant 0 : index
    %2 = vector.load %arg2[%c0_1, %c0_2] : memref<32x32xbf16, #tpu.memory_space<vmem>>, vector<32x32xbf16>
    %cst = arith.constant dense<0.000000e+00> : vector<8x32xf32>
    %3 = tpu.matmul %1, %2, %cst {dimension_numbers = #tpu.dot_dimension_numbers<[1], [0], [0], [1], [0, 0, 1, 1], [], []>} : vector<8x32xbf16>, vector<32x32xbf16>, vector<8x32xf32> -> vector<8x32xf32>
    %c0_3 = arith.constant 0 : index
    %c0_4 = arith.constant 0 : index
    %4 = vector.load %arg3[%c0_3, %c0_4] : memref<1x32xf32, #tpu.memory_space<vmem>>, vector<1x32xf32>
    %5 = vector.broadcast %4 : vector<1x32xf32> to vector<8x32xf32>
    %6 = arith.addf %3, %5 : vector<8x32xf32>
    %cst_5 = arith.constant 0.000000e+00 : f32
    %7 = vector.broadcast %cst_5 : f32 to vector<8x32xf32>
    %8 = arith.maximumf %6, %7 : vector<8x32xf32>
    %c0_6 = arith.constant 0 : index
    %c0_7 = arith.constant 0 : index
    %9 = vector.load %arg4[%c0_6, %c0_7] : memref<32x1xf32, #tpu.memory_space<vmem>>, vector<32x1xf32>
    %cst_8 = arith.constant dense<0.000000e+00> : vector<8x1xf32>
    %10 = tpu.matmul %8, %9, %cst_8 {dimension_numbers = #tpu.dot_dimension_numbers<[1], [0], [0], [1], [0, 0, 1, 1], [], []>} : vector<8x32xf32>, vector<32x1xf32>, vector<8x1xf32> -> vector<8x1xf32>
    %c0_9 = arith.constant 0 : index
    %11 = memref.load %arg5[%c0_9] : memref<1xf32, #tpu.memory_space<smem>>
    %12 = vector.broadcast %11 : f32 to vector<8x1xf32>
    %13 = arith.addf %10, %12 : vector<8x1xf32>
    %c0_10 = arith.constant 0 : index
    %c0_11 = arith.constant 0 : index
    %14 = vector.load %arg6[%c0_10, %c0_11] : memref<8x1xf32, #tpu.memory_space<vmem>>, vector<8x1xf32>
    tpu.vector_store %arg6[%c0_10, %c0_11], %13 {strides = array<i32>} : memref<8x1xf32, #tpu.memory_space<vmem>>, vector<8x1xf32>,
    return
  }
  func.func @transform_0(%arg0: i32) -> (i32, i32) {
    %c0_i32 = arith.constant 0 : i32
    %c0_i32_0 = arith.constant 0 : i32
    return %arg0, %c0_i32 : i32, i32
  }
  func.func @transform_1(%arg0: i32) -> (i32, i32) {
    %c0_i32 = arith.constant 0 : i32
    %c0_i32_0 = arith.constant 0 : i32
    %c0_i32_1 = arith.constant 0 : i32
    return %c0_i32, %c0_i32_0 : i32, i32
  }
  func.func @transform_2(%arg0: i32) -> (i32, i32) {
    %c0_i32 = arith.constant 0 : i32
    %c0_i32_0 = arith.constant 0 : i32
    %c0_i32_1 = arith.constant 0 : i32
    return %c0_i32, %c0_i32_0 : i32, i32
  }
  func.func @transform_3(%arg0: i32) -> (i32, i32) {
    %c0_i32 = arith.constant 0 : i32
    %c0_i32_0 = arith.constant 0 : i32
    %c0_i32_1 = arith.constant 0 : i32
    return %c0_i32, %c0_i32_0 : i32, i32
  }
  func.func @transform_4(%arg0: i32) -> i32 {
    %c0_i32 = arith.constant 0 : i32
    %c0_i32_0 = arith.constant 0 : i32
    return %c0_i32 : i32
  }
  func.func @transform_5(%arg0: i32) -> (i32, i32) {
    %c0_i32 = arith.constant 0 : i32
    %c0_i32_0 = arith.constant 0 : i32
    return %arg0, %c0_i32 : i32, i32
  }
}

module attributes {stable_mosaic.version = 11 : i64} {
  func.func @_ne_mot_kernel(%arg0: i32, %arg1: memref<8x32xf32, #tpu.memory_space<vmem>>, %arg2: memref<32x32xbf16, #tpu.memory_space<vmem>>, %arg3: memref<1x32xf32, #tpu.memory_space<vmem>>, %arg4: memref<32x1xf32, #tpu.memory_space<vmem>>, %arg5: memref<1xf32, #tpu.memory_space<smem>>, %arg6: memref<8x1xf32, #tpu.memory_space<vmem>>) attributes {dimension_semantics = [#tpu.dimension_semantics<parallel>], iteration_bounds = array<i64: 1>, scalar_prefetch = 0 : i64, scratch_operands = 0 : i64, tpu.core_type = #tpu.core_type<tc>, window_params = [{transform_indices = @transform_0, window_bounds = array<i64: 8, 32>}, {pipeline_mode = #tpu.pipeline_mode<synchronous>, transform_indices = @transform_1, window_bounds = array<i64: 32, 32>}, {pipeline_mode = #tpu.pipeline_mode<synchronous>, transform_indices = @transform_2, window_bounds = array<i64: 1, 32>}, {pipeline_mode = #tpu.pipeline_mode<synchronous>, transform_indices = @transform_3, window_bounds = array<i64: 32, 1>}, {transform_indices = @transform_4, window_bounds = array<i64: 1>}, {transform_indices = @transform_5, window_bounds = array<i64: 8, 1>}]} {
    %c0 = arith.constant 0 : index
    %c0_0 = arith.constant 0 : index
    %0 = vector.load %arg1[%c0, %c0_0] : memref<8x32xf32, #tpu.memory_space<vmem>>, vector<8x32xf32>
    %1 = arith.truncf %0 : vector<8x32xf32> to vector<8x32xbf16>
    %c0_1 = arith.constant 0 : index
    %c0_2 = arith.constant 0 : index
    %2 = vector.load %arg2[%c0_1, %c0_2] : memref<32x32xbf16, #tpu.memory_space<vmem>>, vector<32x32xbf16>
    %cst = arith.constant dense<0.000000e+00> : vector<8x32xf32>
    %3 = tpu.matmul %1, %2, %cst {dimension_numbers = #tpu.dot_dimension_numbers<[1], [0], [0], [1], [0, 0, 1, 1], [], []>} : vector<8x32xbf16>, vector<32x32xbf16>, vector<8x32xf32> -> vector<8x32xf32>
    %c0_3 = arith.constant 0 : index
    %c0_4 = arith.constant 0 : index
    %4 = vector.load %arg3[%c0_3, %c0_4] : memref<1x32xf32, #tpu.memory_space<vmem>>, vector<1x32xf32>
    %5 = vector.broadcast %4 : vector<1x32xf32> to vector<8x32xf32>
    %6 = arith.addf %3, %5 : vector<8x32xf32>
    %cst_5 = arith.constant 0.000000e+00 : f32
    %7 = vector.broadcast %cst_5 : f32 to vector<8x32xf32>
    %8 = arith.maximumf %6, %7 : vector<8x32xf32>
    %c0_6 = arith.constant 0 : index
    %c0_7 = arith.constant 0 : index
    %9 = vector.load %arg4[%c0_6, %c0_7] : memref<32x1xf32, #tpu.memory_space<vmem>>, vector<32x1xf32>
    %cst_8 = arith.constant dense<0.000000e+00> : vector<8x1xf32>
    %10 = tpu.matmul %8, %9, %cst_8 {dimension_numbers = #tpu.dot_dimension_numbers<[1], [0], [0], [1], [0, 0, 1, 1], [], []>} : vector<8x32xf32>, vector<32x1xf32>, vector<8x1xf32> -> vector<8x1xf32>
    %c0_9 = arith.constant 0 : index
    %11 = memref.load %arg5[%c0_9] : memref<1xf32, #tpu.memory_space<smem>>
    %12 = vector.broadcast %11 : f32 to vector<8x1xf32>
    %13 = arith.addf %10, %12 : vector<8x1xf32>
    %c0_10 = arith.constant 0 : index
    %c0_11 = arith.constant 0 : index
    %14 = vector.load %arg6[%c0_10, %c0_11] : memref<8x1xf32, #tpu.memory_space<vmem>>, vector<8x1xf32>
    tpu.vector_store %arg6[%c0_10, %c0_11], %13 {strides = array<i32>} : memref<8x1xf32, #tpu.memory_space<vmem>>, vector<8x1xf32>,
    return
  }
  func.func @transform_0(%arg0: i32) -> (i32, i32) {
    %c0_i32 = arith.constant 0 : i32
    %c0_i32_0 = arith.constant 0 : i32
    return %arg0, %c0_i32 : i32, i32
  }
  func.func @transform_1(%arg0: i32) -> (i32, i32) {
    %c0_i32 = arith.constant 0 : i32
    %c0_i32_0 = arith.constant 0 : i32
    %c0_i32_1 = arith.constant 0 : i32
    return %c0_i32, %c0_i32_0 : i32, i32
  }
  func.func @transform_2(%arg0: i32) -> (i32, i32) {
    %c0_i32 = arith.constant 0 : i32
    %c0_i32_0 = arith.constant 0 : i32
    %c0_i32_1 = arith.constant 0 : i32
    return %c0_i32, %c0_i32_0 : i32, i32
  }
  func.func @transform_3(%arg0: i32) -> (i32, i32) {
    %c0_i32 = arith.constant 0 : i32
    %c0_i32_0 = arith.constant 0 : i32
    %c0_i32_1 = arith.constant 0 : i32
    return %c0_i32, %c0_i32_0 : i32, i32
  }
  func.func @transform_4(%arg0: i32) -> i32 {
    %c0_i32 = arith.constant 0 : i32
    %c0_i32_0 = arith.constant 0 : i32
    return %c0_i32 : i32
  }
  func.func @transform_5(%arg0: i32) -> (i32, i32) {
    %c0_i32 = arith.constant 0 : i32
    %c0_i32_0 = arith.constant 0 : i32
    return %arg0, %c0_i32 : i32, i32
  }
}

</mosaic_0001>

<llo_original>
// kernel: tpu_custom_call.1
$region0: #{tpu_custom_call.1}
  #allocation0 [shape = 'u32[]', space=smem, size = 0x4, offset = 0x4, fixed_abs, tag = 'smem constant byte address 0x4 - core index']
  #allocation1 [shape = 'u32[144,128]{1,0:T(1,128)}', space=vmem, size = 0x12000, scoped, tag = 'internal scratch']
  #allocation2 [shape = 'f32[1]{0:T(128)S(6)}', space=smem, size = 0x200, scoped, tag = 'scoped memory for tpu_custom_call.1']
  %s0 = inlined_call_operand.vmem [shape: f32[8,32], index: 0, kind: input, shape index: {}]
  %s1 = inlined_call_operand.vmem [shape: bf16[32,32], index: 1, kind: input, shape index: {}]
  %s2 = inlined_call_operand.vmem [shape: f32[1,32], index: 2, kind: input, shape index: {}]
  %s3 = inlined_call_operand.vmem [shape: f32[32,1], index: 3, kind: input, shape index: {}]
  %s4 = inlined_call_operand.<no memory space> [shape: f32[1], index: 4, kind: input, shape index: {}]
  %s5 = inlined_call_operand.vmem [shape: f32[8,1], index: 5, kind: output, shape index: {}]
  %s6 = sld [smem:[#allocation0]]
  $region30: #{tpu_custom_call.1} parent=0
    _
  %s8 = ssub.s32 1, %s6
  %s9 = scalar_select 0, %s8, %s6
  %10 = sst [smem:[#allocation2]] %s4
  // Predicated region
  $region2: #{tpu_custom_call.1} parent=0 // pred_check
    _
  $region3: #{tpu_custom_call.1} parent=0 // pred_check_branch
    %12 = sbr.rel (0) target = $region5
  $region4: #{tpu_custom_call.1} parent=0 // pred_region
    _
  $region5: #{tpu_custom_call.1} parent=0 // pred_fallthru
    _
  // Predicated region
  $region6: #{tpu_custom_call.1} parent=0 // pred_check
    _
  $region7: #{tpu_custom_call.1} parent=0 // pred_check_branch
    %14 = sbr.rel (0) target = $region9
  $region8: #{tpu_custom_call.1} parent=0 // pred_region
    _
  $region9: #{tpu_custom_call.1} parent=0 // pred_fallthru
    _
  // Predicated region
  $region10: #{tpu_custom_call.1} parent=0 // pred_check
    _
  $region11: #{tpu_custom_call.1} parent=0 // pred_check_branch
    %16 = sbr.rel (0) target = $region13
  $region12: #{tpu_custom_call.1} parent=0 // pred_region
    _
  $region13: #{tpu_custom_call.1} parent=0 // pred_fallthru
    _
  // Predicated region
  $region14: #{tpu_custom_call.1} parent=0 // pred_check
    _
  $region15: #{tpu_custom_call.1} parent=0 // pred_check_branch
    %18 = sbr.rel (0) target = $region17
  $region16: #{tpu_custom_call.1} parent=0 // pred_region
    _
  $region17: #{tpu_custom_call.1} parent=0 // pred_fallthru
    _
  // Predicated region
  $region18: #{tpu_custom_call.1} parent=0 // pred_check
    _
  $region19: #{tpu_custom_call.1} parent=0 // pred_check_branch
    %20 = sbr.rel (0) target = $region21
  $region20: #{tpu_custom_call.1} parent=0 // pred_region
    _
  $region21: #{tpu_custom_call.1} parent=0 // pred_fallthru
    _
  %v22 = vld [vmem:[%s0] sm:$0xff]
  %v23 = vpack.c.bf16 %v22, %v22
  %v24 = vld [vmem:[%s1] sm:$0xf]
  %v25 = vld [vmem:[%s1 + $0x4] sm:$0xf]
  %v26 = vld [vmem:[%s1 + $0x8] sm:$0xf]
  %v27 = vld [vmem:[%s1 + $0xc] sm:$0xf]
  %v28 = vld [vmem:[%s2] sm:$0x1]
  %v30 = vlaneseq
  %v31 = vshrl.u32 %v30, 7
  %v32 = vsub.s32 0, %v31
  %v33 = vrot.slane %v28, %v32
  %v39 = vunpack.c.l.b16 %v24
  %v40 = vunpack.c.l.b16 %v25
  %v41 = vunpack.c.l.b16 %v26
  %v42 = vunpack.c.l.b16 %v27
  %v43 = vpack.c.b16 %v40, %v39
  %v44 = vpack.c.b16 %v42, %v41
  %vm47 = vcmask 261120
  %v49 = vsel %vm47, %v23, 0
  %51 = vmatprep.subr.bf16.mxu0 0
  %52 = vmatpush1.bf16.msra.mxu0 %v43
  %53 = vmatprep.subr.bf16.mxu0 0
  %54 = vmatpush1.bf16.msra.mxu0 %v44
  %55 = vmatprep.subr.bf16.mxu0 0
  %56 = vmatpush1.bf16.msra.mxu0 0
  %57 = vmatprep.subr.bf16.mxu0 0
  %58 = vmatpush1.bf16.msra.mxu0 0
  %59 = vmatprep.subr.bf16.mxu0 0
  %60 = vmatpush1.bf16.msra.mxu0 0
  %61 = vmatprep.subr.bf16.mxu0 0
  %62 = vmatpush1.bf16.msra.mxu0 0
  %63 = vmatprep.subr.bf16.mxu0 0
  %64 = vmatpush1.bf16.msra.mxu0 0
  %65 = vmatprep.subr.bf16.mxu0 0
  %66 = vmatpush1.bf16.msra.mxu0 0
  %67 = vmatprep.subr.bf16.mxu0 0
  %68 = vmatpush1.bf16.msra.mxu0 0
  %69 = vmatprep.subr.bf16.mxu0 0
  %70 = vmatpush1.bf16.msra.mxu0 0
  %71 = vmatprep.subr.bf16.mxu0 0
  %72 = vmatpush1.bf16.msra.mxu0 0
  %73 = vmatprep.subr.bf16.mxu0 0
  %74 = vmatpush1.bf16.msra.mxu0 0
  %75 = vmatprep.subr.bf16.mxu0 0
  %76 = vmatpush1.bf16.msra.mxu0 0
  %77 = vmatprep.subr.bf16.mxu0 0
  %78 = vmatpush1.bf16.msra.mxu0 0
  %79 = vmatprep.subr.bf16.mxu0 0
  %80 = vmatpush1.bf16.msra.mxu0 0
  %81 = vmatprep.subr.bf16.mxu0 0
  %82 = vmatpush1.bf16.msra.mxu0 0
  %83 = vmatprep.mubr.bf16.mxu0 0
  %84 = vmatmul.mubr.bf16.gmra.mrb[0].mxu0 %v49
  %v85 = vpop.f32.mrb[0].mxu0
  %v86 = vadd.f32 %v33, %v85
  %v87 = vpop.f32.mrb[0].mxu0
  %v88 = vpop.f32.mrb[0].mxu0
  %v89 = vpop.f32.mrb[0].mxu0
  %90 = vdwg.mxu0
  %v91 = vmax.f32 %v86, 0.0
  %v92 = vld [vmem:[%s3] sm:$0xff]
  %v93 = vld [vmem:[%s3 + $0x8] sm:$0xff]
  %v94 = vld [vmem:[%s3 + $0x10] sm:$0xff]
  %v95 = vld [vmem:[%s3 + $0x18] sm:$0xff]
  %s96 = sld [smem:[#allocation2]]
  %v97 = vstv %s96
  %v99 = vsel %vm47, %v91, 0
  %101 = vmatprep.subr.mxu0 0.0
  %102 = vmatpush1.msra.mxu0 %v92
  %103 = vmatprep.subr.mxu0 0.0
  %104 = vmatpush1.msra.mxu0 %v93
  %105 = vmatprep.subr.mxu0 0.0
  %106 = vmatpush1.msra.mxu0 %v94
  %107 = vmatprep.subr.mxu0 0.0
  %108 = vmatpush1.msra.mxu0 %v95
  %109 = vmatprep.subr.mxu0 0.0
  %110 = vmatpush1.msra.mxu0 0.0
  %111 = vmatprep.subr.mxu0 0.0
  %112 = vmatpush1.msra.mxu0 0.0
  %113 = vmatprep.subr.mxu0 0.0
  %114 = vmatpush1.msra.mxu0 0.0
  %115 = vmatprep.subr.mxu0 0.0
  %116 = vmatpush1.msra.mxu0 0.0
  %117 = vmatprep.subr.mxu0 0.0
  %118 = vmatpush1.msra.mxu0 0.0
  %119 = vmatprep.subr.mxu0 0.0
  %120 = vmatpush1.msra.mxu0 0.0
  %121 = vmatprep.subr.mxu0 0.0
  %122 = vmatpush1.msra.mxu0 0.0
  %123 = vmatprep.subr.mxu0 0.0
  %124 = vmatpush1.msra.mxu0 0.0
  %125 = vmatprep.subr.mxu0 0.0
  %126 = vmatpush1.msra.mxu0 0.0
  %127 = vmatprep.subr.mxu0 0.0
  %128 = vmatpush1.msra.mxu0 0.0
  %129 = vmatprep.subr.mxu0 0.0
  %130 = vmatpush1.msra.mxu0 0.0
  %131 = vmatprep.subr.mxu0 0.0
  %132 = vmatpush1.msra.mxu0 0.0
  %133 = vmatprep.subr.mxu0 0.0
  %134 = vmatpush1.msra.mxu0 0.0
  %135 = vmatprep.subr.mxu0 0.0
  %136 = vmatpush1.msra.mxu0 0.0
  %137 = vmatprep.subr.mxu0 0.0
  %138 = vmatpush1.msra.mxu0 0.0
  %139 = vmatprep.subr.mxu0 0.0
  %140 = vmatpush1.msra.mxu0 0.0
  %141 = vmatprep.subr.mxu0 0.0
  %142 = vmatpush1.msra.mxu0 0.0
  %143 = vmatprep.subr.mxu0 0.0
  %144 = vmatpush1.msra.mxu0 0.0
  %145 = vmatprep.subr.mxu0 0.0
  %146 = vmatpush1.msra.mxu0 0.0
  %147 = vmatprep.subr.mxu0 0.0
  %148 = vmatpush1.msra.mxu0 0.0
  %149 = vmatprep.subr.mxu0 0.0
  %150 = vmatpush1.msra.mxu0 0.0
  %151 = vmatprep.subr.mxu0 0.0
  %152 = vmatpush1.msra.mxu0 0.0
  %153 = vmatprep.subr.mxu0 0.0
  %154 = vmatpush1.msra.mxu0 0.0
  %155 = vmatprep.subr.mxu0 0.0
  %156 = vmatpush1.msra.mxu0 0.0
  %157 = vmatprep.subr.mxu0 0.0
  %158 = vmatpush1.msra.mxu0 0.0
  %159 = vmatprep.subr.mxu0 0.0
  %160 = vmatpush1.msra.mxu0 0.0
  %161 = vmatprep.subr.mxu0 0.0
  %162 = vmatpush1.msra.mxu0 0.0
  %163 = vmatprep.subr.mxu0 0.0
  %164 = vmatpush1.msra.mxu0 0.0
  %165 = vmatprep.mubr.f32.mxu0 0.0
  %166 = vmatmul.mubr.f32.gmra.mrb[0].mxu0 %v99
  %v167 = vpop.f32.mrb[0].mxu0
  %v168 = vadd.f32 %v97, %v167
  %v169 = vpop.f32.mrb[0].mxu0
  %170 = vdwg.mxu0
  %vm171 = vcmask 7168
  %172 = vst.msk [vmem:[%s5] sm:$0xff] %vm171, %v168
  // Predicated region
  $region22: #{tpu_custom_call.1} parent=0 // pred_check
    _
  $region23: #{tpu_custom_call.1} parent=0 // pred_check_branch
    %174 = sbr.rel (0) target = $region25
  $region24: #{tpu_custom_call.1} parent=0 // pred_region
    _
  $region25: #{tpu_custom_call.1} parent=0 // pred_fallthru
    _
  // Predicated region
  $region26: #{tpu_custom_call.1} parent=0 // pred_check
    _
  $region27: #{tpu_custom_call.1} parent=0 // pred_check_branch
    %176 = sbr.rel (0) target = $region29
  $region28: #{tpu_custom_call.1} parent=0 // pred_region
    _
  $region29: #{tpu_custom_call.1} parent=0 // pred_fallthru
    _

// kernel: tpu_custom_call.1
$region0: #{tpu_custom_call.1}
  #allocation0 [shape = 'u32[]', space=smem, size = 0x4, offset = 0x4, fixed_abs, tag = 'smem constant byte address 0x4 - core index']
  #allocation1 [shape = 'u32[144,128]{1,0:T(1,128)}', space=vmem, size = 0x12000, scoped, tag = 'internal scratch']
  #allocation2 [shape = 'f32[1]{0:T(128)S(6)}', space=smem, size = 0x200, scoped, tag = 'scoped memory for tpu_custom_call.1']
  %s0 = inlined_call_operand.vmem [shape: f32[8,32], index: 0, kind: input, shape index: {}]
  %s1 = inlined_call_operand.vmem [shape: bf16[32,32], index: 1, kind: input, shape index: {}]
  %s2 = inlined_call_operand.vmem [shape: f32[1,32], index: 2, kind: input, shape index: {}]
  %s3 = inlined_call_operand.vmem [shape: f32[32,1], index: 3, kind: input, shape index: {}]
  %s4 = inlined_call_operand.<no memory space> [shape: f32[1], index: 4, kind: input, shape index: {}]
  %s5 = inlined_call_operand.vmem [shape: f32[8,1], index: 5, kind: output, shape index: {}]
  %s6 = sld [smem:[#allocation0]]
  $region30: #{tpu_custom_call.1} parent=0
    _
  %s8 = ssub.s32 1, %s6
  %s9 = scalar_select 0, %s8, %s6
  %10 = sst [smem:[#allocation2]] %s4
  // Predicated region
  $region2: #{tpu_custom_call.1} parent=0 // pred_check
    _
  $region3: #{tpu_custom_call.1} parent=0 // pred_check_branch
    %12 = sbr.rel (0) target = $region5
  $region4: #{tpu_custom_call.1} parent=0 // pred_region
    _
  $region5: #{tpu_custom_call.1} parent=0 // pred_fallthru
    _
  // Predicated region
  $region6: #{tpu_custom_call.1} parent=0 // pred_check
    _
  $region7: #{tpu_custom_call.1} parent=0 // pred_check_branch
    %14 = sbr.rel (0) target = $region9
  $region8: #{tpu_custom_call.1} parent=0 // pred_region
    _
  $region9: #{tpu_custom_call.1} parent=0 // pred_fallthru
    _
  // Predicated region
  $region10: #{tpu_custom_call.1} parent=0 // pred_check
    _
  $region11: #{tpu_custom_call.1} parent=0 // pred_check_branch
    %16 = sbr.rel (0) target = $region13
  $region12: #{tpu_custom_call.1} parent=0 // pred_region
    _
  $region13: #{tpu_custom_call.1} parent=0 // pred_fallthru
    _
  // Predicated region
  $region14: #{tpu_custom_call.1} parent=0 // pred_check
    _
  $region15: #{tpu_custom_call.1} parent=0 // pred_check_branch
    %18 = sbr.rel (0) target = $region17
  $region16: #{tpu_custom_call.1} parent=0 // pred_region
    _
  $region17: #{tpu_custom_call.1} parent=0 // pred_fallthru
    _
  // Predicated region
  $region18: #{tpu_custom_call.1} parent=0 // pred_check
    _
  $region19: #{tpu_custom_call.1} parent=0 // pred_check_branch
    %20 = sbr.rel (0) target = $region21
  $region20: #{tpu_custom_call.1} parent=0 // pred_region
    _
  $region21: #{tpu_custom_call.1} parent=0 // pred_fallthru
    _
  %v22 = vld [vmem:[%s0] sm:$0xff]
  %v23 = vpack.c.bf16 %v22, %v22
  %v24 = vld [vmem:[%s1] sm:$0xf]
  %v25 = vld [vmem:[%s1 + $0x4] sm:$0xf]
  %v26 = vld [vmem:[%s1 + $0x8] sm:$0xf]
  %v27 = vld [vmem:[%s1 + $0xc] sm:$0xf]
  %v28 = vld [vmem:[%s2] sm:$0x1]
  %v30 = vlaneseq
  %v31 = vshrl.u32 %v30, 7
  %v32 = vsub.s32 0, %v31
  %v33 = vrot.slane %v28, %v32
  %v39 = vunpack.c.l.b16 %v24
  %v40 = vunpack.c.l.b16 %v25
  %v41 = vunpack.c.l.b16 %v26
  %v42 = vunpack.c.l.b16 %v27
  %v43 = vpack.c.b16 %v40, %v39
  %v44 = vpack.c.b16 %v42, %v41
  %vm47 = vcmask 261120
  %v49 = vsel %vm47, %v23, 0
  %51 = vmatprep.subr.bf16.mxu0 0
  %52 = vmatpush1.bf16.msra.mxu0 %v43
  %53 = vmatprep.subr.bf16.mxu0 0
  %54 = vmatpush1.bf16.msra.mxu0 %v44
  %55 = vmatprep.subr.bf16.mxu0 0
  %56 = vmatpush1.bf16.msra.mxu0 0
  %57 = vmatprep.subr.bf16.mxu0 0
  %58 = vmatpush1.bf16.msra.mxu0 0
  %59 = vmatprep.subr.bf16.mxu0 0
  %60 = vmatpush1.bf16.msra.mxu0 0
  %61 = vmatprep.subr.bf16.mxu0 0
  %62 = vmatpush1.bf16.msra.mxu0 0
  %63 = vmatprep.subr.bf16.mxu0 0
  %64 = vmatpush1.bf16.msra.mxu0 0
  %65 = vmatprep.subr.bf16.mxu0 0
  %66 = vmatpush1.bf16.msra.mxu0 0
  %67 = vmatprep.subr.bf16.mxu0 0
  %68 = vmatpush1.bf16.msra.mxu0 0
  %69 = vmatprep.subr.bf16.mxu0 0
  %70 = vmatpush1.bf16.msra.mxu0 0
  %71 = vmatprep.subr.bf16.mxu0 0
  %72 = vmatpush1.bf16.msra.mxu0 0
  %73 = vmatprep.subr.bf16.mxu0 0
  %74 = vmatpush1.bf16.msra.mxu0 0
  %75 = vmatprep.subr.bf16.mxu0 0
  %76 = vmatpush1.bf16.msra.mxu0 0
  %77 = vmatprep.subr.bf16.mxu0 0
  %78 = vmatpush1.bf16.msra.mxu0 0
  %79 = vmatprep.subr.bf16.mxu0 0
  %80 = vmatpush1.bf16.msra.mxu0 0
  %81 = vmatprep.subr.bf16.mxu0 0
  %82 = vmatpush1.bf16.msra.mxu0 0
  %83 = vmatprep.mubr.bf16.mxu0 0
  %84 = vmatmul.mubr.bf16.gmra.mrb[0].mxu0 %v49
  %v85 = vpop.f32.mrb[0].mxu0
  %v86 = vadd.f32 %v33, %v85
  %v87 = vpop.f32.mrb[0].mxu0
  %v88 = vpop.f32.mrb[0].mxu0
  %v89 = vpop.f32.mrb[0].mxu0
  %90 = vdwg.mxu0
  %v91 = vmax.f32 %v86, 0.0
  %v92 = vld [vmem:[%s3] sm:$0xff]
  %v93 = vld [vmem:[%s3 + $0x8] sm:$0xff]
  %v94 = vld [vmem:[%s3 + $0x10] sm:$0xff]
  %v95 = vld [vmem:[%s3 + $0x18] sm:$0xff]
  %s96 = sld [smem:[#allocation2]]
  %v97 = vstv %s96
  %v99 = vsel %vm47, %v91, 0
  %101 = vmatprep.subr.mxu0 0.0
  %102 = vmatpush1.msra.mxu0 %v92
  %103 = vmatprep.subr.mxu0 0.0
  %104 = vmatpush1.msra.mxu0 %v93
  %105 = vmatprep.subr.mxu0 0.0
  %106 = vmatpush1.msra.mxu0 %v94
  %107 = vmatprep.subr.mxu0 0.0
  %108 = vmatpush1.msra.mxu0 %v95
  %109 = vmatprep.subr.mxu0 0.0
  %110 = vmatpush1.msra.mxu0 0.0
  %111 = vmatprep.subr.mxu0 0.0
  %112 = vmatpush1.msra.mxu0 0.0
  %113 = vmatprep.subr.mxu0 0.0
  %114 = vmatpush1.msra.mxu0 0.0
  %115 = vmatprep.subr.mxu0 0.0
  %116 = vmatpush1.msra.mxu0 0.0
  %117 = vmatprep.subr.mxu0 0.0
  %118 = vmatpush1.msra.mxu0 0.0
  %119 = vmatprep.subr.mxu0 0.0
  %120 = vmatpush1.msra.mxu0 0.0
  %121 = vmatprep.subr.mxu0 0.0
  %122 = vmatpush1.msra.mxu0 0.0
  %123 = vmatprep.subr.mxu0 0.0
  %124 = vmatpush1.msra.mxu0 0.0
  %125 = vmatprep.subr.mxu0 0.0
  %126 = vmatpush1.msra.mxu0 0.0
  %127 = vmatprep.subr.mxu0 0.0
  %128 = vmatpush1.msra.mxu0 0.0
  %129 = vmatprep.subr.mxu0 0.0
  %130 = vmatpush1.msra.mxu0 0.0
  %131 = vmatprep.subr.mxu0 0.0
  %132 = vmatpush1.msra.mxu0 0.0
  %133 = vmatprep.subr.mxu0 0.0
  %134 = vmatpush1.msra.mxu0 0.0
  %135 = vmatprep.subr.mxu0 0.0
  %136 = vmatpush1.msra.mxu0 0.0
  %137 = vmatprep.subr.mxu0 0.0
  %138 = vmatpush1.msra.mxu0 0.0
  %139 = vmatprep.subr.mxu0 0.0
  %140 = vmatpush1.msra.mxu0 0.0
  %141 = vmatprep.subr.mxu0 0.0
  %142 = vmatpush1.msra.mxu0 0.0
  %143 = vmatprep.subr.mxu0 0.0
  %144 = vmatpush1.msra.mxu0 0.0
  %145 = vmatprep.subr.mxu0 0.0
  %146 = vmatpush1.msra.mxu0 0.0
  %147 = vmatprep.subr.mxu0 0.0
  %148 = vmatpush1.msra.mxu0 0.0
  %149 = vmatprep.subr.mxu0 0.0
  %150 = vmatpush1.msra.mxu0 0.0
  %151 = vmatprep.subr.mxu0 0.0
  %152 = vmatpush1.msra.mxu0 0.0
  %153 = vmatprep.subr.mxu0 0.0
  %154 = vmatpush1.msra.mxu0 0.0
  %155 = vmatprep.subr.mxu0 0.0
  %156 = vmatpush1.msra.mxu0 0.0
  %157 = vmatprep.subr.mxu0 0.0
  %158 = vmatpush1.msra.mxu0 0.0
  %159 = vmatprep.subr.mxu0 0.0
  %160 = vmatpush1.msra.mxu0 0.0
  %161 = vmatprep.subr.mxu0 0.0
  %162 = vmatpush1.msra.mxu0 0.0
  %163 = vmatprep.subr.mxu0 0.0
  %164 = vmatpush1.msra.mxu0 0.0
  %165 = vmatprep.mubr.f32.mxu0 0.0
  %166 = vmatmul.mubr.f32.gmra.mrb[0].mxu0 %v99
  %v167 = vpop.f32.mrb[0].mxu0
  %v168 = vadd.f32 %v97, %v167
  %v169 = vpop.f32.mrb[0].mxu0
  %170 = vdwg.mxu0
  %vm171 = vcmask 7168
  %172 = vst.msk [vmem:[%s5] sm:$0xff] %vm171, %v168
  // Predicated region
  $region22: #{tpu_custom_call.1} parent=0 // pred_check
    _
  $region23: #{tpu_custom_call.1} parent=0 // pred_check_branch
    %174 = sbr.rel (0) target = $region25
  $region24: #{tpu_custom_call.1} parent=0 // pred_region
    _
  $region25: #{tpu_custom_call.1} parent=0 // pred_fallthru
    _
  // Predicated region
  $region26: #{tpu_custom_call.1} parent=0 // pred_check
    _
  $region27: #{tpu_custom_call.1} parent=0 // pred_check_branch
    %176 = sbr.rel (0) target = $region29
  $region28: #{tpu_custom_call.1} parent=0 // pred_region
    _
  $region29: #{tpu_custom_call.1} parent=0 // pred_fallthru
    _

</llo_original>
